<compile_context>
chip_gen: v7x
topology: tpu7x:2x2x1
jax: 0.10.0
libtpu: 0.0.40
codegen_flags: <defaults>
</compile_context>

<pallas_src>
import jax
import jax.numpy as jnp
from jax.experimental import pallas as pl
from jax.experimental.pallas import tpu as pltpu


def _scale_kernel(a_ref, x_ref, o_ref):
    # a_ref: (1, 1) f32 scalar in SMEM; x_ref / o_ref: (tile_r, lane) VMEM tiles.
    a = a_ref[0, 0].astype(x_ref.dtype)
    o_ref[...] = (a * x_ref[...]).astype(o_ref.dtype)


def _round_up(n, m):
    return ((n + m - 1) // m) * m


def discriminator_forward(a, x, *, lane=512, max_tile_rows=1024, donate_input=False):
    """Compute a * x (elementwise scalar scale).

    a: shape (1,) float32 parameter; x: arbitrary-shape array (e.g. NCHW).
    """
    orig_shape = x.shape
    orig_dtype = x.dtype
    n_elem = x.size
    itemsize = jnp.dtype(orig_dtype).itemsize

    # Sublane packing alignment for the second-minor dim: f32 -> 8, bf16 -> 16, i8 -> 32.
    sub_align = max(8, 32 // itemsize)

    # Pick the row tile first, then pad the flat length so rows % tile_r == 0.
    # This guarantees every block is exactly (tile_r, lane): no masked partial
    # stores, no overhang blocks.
    target_rows = _round_up(pl.cdiv(n_elem, lane), sub_align)
    tile_r = min(max_tile_rows, target_rows)          # multiple of sub_align
    padded = _round_up(n_elem, tile_r * lane)
    rows = padded // lane                              # exact multiple of tile_r
    grid = (rows // tile_r,)

    x_flat = x.reshape(-1)
    if padded != n_elem:
        x_flat = jnp.pad(x_flat, (0, padded - n_elem))
    x2d = x_flat.reshape(rows, lane)

    # Block budget: (tile_r, lane) input + output, double-buffered.
    block_bytes = tile_r * lane * itemsize
    vmem_limit = int(min(max(8 * block_bytes, 8 << 20), 32 << 20))

    a2d = a.reshape(1, 1).astype(jnp.float32)

    kwargs = {}
    if donate_input:
        # Reuse x's padded HBM buffer for the output (arg 1 -> output 0).
        kwargs["input_output_aliases"] = {1: 0}

    out2d = pl.pallas_call(
        _scale_kernel,
        out_shape=jax.ShapeDtypeStruct((rows, lane), orig_dtype),
        grid=grid,
        in_specs=[
            pl.BlockSpec(memory_space=pltpu.SMEM),            # scalar `a`
            pl.BlockSpec((tile_r, lane), lambda i: (i, 0)),   # streamed x tiles
        ],
        out_specs=pl.BlockSpec((tile_r, lane), lambda i: (i, 0)),
        compiler_params=pltpu.CompilerParams(
            dimension_semantics=("parallel",),
            vmem_limit_bytes=vmem_limit,
        ),
        **kwargs,
    )(a2d, x2d)

    out_flat = out2d.reshape(-1)
    if padded != n_elem:
        out_flat = out_flat[:n_elem]
    return out_flat.reshape(orig_shape)


if __name__ == "__main__":
    key = jax.random.PRNGKey(0)
    k_a, k_x1, k_x2 = jax.random.split(key, 3)

    # Deterministic init mirroring torch.rand(1) for the parameter `a`.
    a = jax.random.uniform(k_a, (1,), dtype=jnp.float32)

    # 1) Small NCHW float32 input (128-divisible element count).
    x1 = jax.random.normal(k_x1, (2, 4, 16, 16), dtype=jnp.float32)
    out1 = jax.block_until_ready(discriminator_forward(a, x1))
    ref1 = a[0] * x1
    assert out1.shape == x1.shape
    assert out1.dtype == x1.dtype
    assert jnp.allclose(out1, ref1, rtol=1e-6, atol=1e-6)

    # 2) Non-aligned element count exercises the padding path.
    x2 = jax.random.normal(k_x2, (3, 5, 7, 11), dtype=jnp.float32)
    out2 = jax.block_until_ready(discriminator_forward(a, x2))
    ref2 = a[0] * x2
    assert out2.shape == x2.shape
    assert jnp.allclose(out2, ref2, rtol=1e-6, atol=1e-6)

    # 3) bfloat16 input exercises the packed-sublane / dtype-cast path.
    x3 = x1.astype(jnp.bfloat16)
    out3 = jax.block_until_ready(discriminator_forward(a, x3))
    ref3 = (a[0] * x1).astype(jnp.float32)
    assert out3.shape == x3.shape
    assert out3.dtype == jnp.bfloat16
    assert jnp.allclose(out3.astype(jnp.float32), ref3, rtol=1e-2, atol=1e-2)

    # 4) Larger input exercises the multi-block (grid > 1) streaming path.
    x4 = jax.random.normal(k_x2, (4, 8, 64, 64), dtype=jnp.float32)
    out4 = jax.block_until_ready(
        discriminator_forward(a, x4, max_tile_rows=128)
    )
    ref4 = a[0] * x4
    assert out4.shape == x4.shape
    assert jnp.allclose(out4, ref4, rtol=1e-6, atol=1e-6)

    print("KERNEL_OK")
</pallas_src>

<mosaic_0001>
module attributes {stable_mosaic.version = 11 : i64} {
  func.func @_scale_kernel(%arg0: i32, %arg1: memref<1x1xf32, #tpu.memory_space<smem>>, %arg2: memref<8x512xf32, #tpu.memory_space<vmem>>, %arg3: memref<8x512xf32, #tpu.memory_space<vmem>>) attributes {dimension_semantics = [#tpu.dimension_semantics<parallel>], iteration_bounds = array<i64: 1>, scalar_prefetch = 0 : i64, scratch_operands = 0 : i64, tpu.core_type = #tpu.core_type<tc>, window_params = [{transform_indices = @transform_0, window_bounds = array<i64: 1, 1>}, {transform_indices = @transform_1, window_bounds = array<i64: 8, 512>}, {transform_indices = @transform_2, window_bounds = array<i64: 8, 512>}]} {
    %c0 = arith.constant 0 : index
    %c0_0 = arith.constant 0 : index
    %0 = memref.load %arg1[%c0, %c0_0] : memref<1x1xf32, #tpu.memory_space<smem>>
    %c0_1 = arith.constant 0 : index
    %c0_2 = arith.constant 0 : index
    %1 = vector.load %arg2[%c0_1, %c0_2] : memref<8x512xf32, #tpu.memory_space<vmem>>, vector<8x512xf32>
    %2 = vector.broadcast %0 : f32 to vector<8x512xf32>
    %3 = arith.mulf %2, %1 : vector<8x512xf32>
    %c0_3 = arith.constant 0 : index
    %c0_4 = arith.constant 0 : index
    %4 = vector.load %arg3[%c0_3, %c0_4] : memref<8x512xf32, #tpu.memory_space<vmem>>, vector<8x512xf32>
    tpu.vector_store %arg3[%c0_3, %c0_4], %3 {strides = array<i32>} : memref<8x512xf32, #tpu.memory_space<vmem>>, vector<8x512xf32>,
    return
  }
  func.func @transform_0(%arg0: i32) -> (i32, i32) {
    %c0_i32 = arith.constant 0 : i32
    %c0_i32_0 = arith.constant 0 : i32
    %c0_i32_1 = arith.constant 0 : i32
    return %c0_i32, %c0_i32_0 : i32, i32
  }
  func.func @transform_1(%arg0: i32) -> (i32, i32) {
    %c0_i32 = arith.constant 0 : i32
    %c0_i32_0 = arith.constant 0 : i32
    return %arg0, %c0_i32 : i32, i32
  }
  func.func @transform_2(%arg0: i32) -> (i32, i32) {
    %c0_i32 = arith.constant 0 : i32
    %c0_i32_0 = arith.constant 0 : i32
    return %arg0, %c0_i32 : i32, i32
  }
}

</mosaic_0001>

<llo_original>
// kernel: tpu_custom_call.1
$region0: #{tpu_custom_call.1}
  #allocation0 [shape = 'u32[]', space=smem, size = 0x4, offset = 0x4, fixed_abs, tag = 'smem constant byte address 0x4 - core index']
  #allocation1 [shape = 'u32[144,128]{1,0:T(1,128)}', space=vmem, size = 0x12000, scoped, tag = 'internal scratch']
  #allocation2 [shape = 'f32[1,1]{1,0:T(1,128)S(6)}', space=smem, size = 0x200, scoped, tag = 'scoped memory for tpu_custom_call.1']
  %s0 = inlined_call_operand.<no memory space> [shape: f32[1,1], index: 0, kind: input, shape index: {}]
  %s1 = inlined_call_operand.hbm [shape: f32[8,512], index: 1, kind: input, shape index: {}]
  %s2 = inlined_call_operand.hbm [shape: f32[8,512], index: 2, kind: output, shape index: {}]
  %s3 = sld [smem:[#allocation0]]
  $region22: #{tpu_custom_call.1} parent=0
    _
  %s5 = ssub.s32 1, %s3
  %s6 = scalar_select 0, %s5, %s3
  %7 = sst [smem:[#allocation2]] %s0
  $region1: #{tpu_custom_call.1} parent=0
    #allocation3 [shape = 'u8[16384]{0}', space=vmem, size = 0x4000, scoped, tag = 'input window, operand 1, single buffered']
    #allocation4 [shape = 's32[1]{0}', space=sflag, size = 0x4, scoped, tag = 'scoped memory for tpu_custom_call.1']
    #allocation5 [shape = 's32[1]{0}', space=sflag, size = 0x4, scoped, tag = 'scoped memory for tpu_custom_call.1']
    #allocation6 [shape = 'u8[16384]{0}', space=vmem, size = 0x4000, scoped, tag = 'output window, operand 0, single buffered']
    %8 = vsyncpa [#allocation4], 0
    %9 = vsyncpa [#allocation5], 0
    // Predicated region
    $region2: #{tpu_custom_call.1} parent=1 // pred_check
      _
    $region3: #{tpu_custom_call.1} parent=1 // pred_check_branch
      %11 = sbr.rel (0) target = $region5
    $region4: #{tpu_custom_call.1} parent=1 // pred_region
      _
    $region5: #{tpu_custom_call.1} parent=1 // pred_fallthru
      _
    // Predicated region
    $region6: #{tpu_custom_call.1} parent=1 // pred_check
      _
    $region7: #{tpu_custom_call.1} parent=1 // pred_check_branch
      %13 = sbr.rel (0) target = $region9
    $region8: #{tpu_custom_call.1} parent=1 // pred_region
      %s15 = ssub.s32 512, 512
      %16 = vsyncadd [#allocation4], %s15
      %s18 = sshll.u32 [#allocation3], 4
      %s19 = int_to_ptr.vmem [resolvable:$true] %s18
      %21 = dma.hbm_to_vmem [thread:$0]  %s1, 512, %s19, [#allocation4]
    $region9: #{tpu_custom_call.1} parent=1 // pred_fallthru
      _
    // Predicated region
    $region10: #{tpu_custom_call.1} parent=1 // pred_check
      _
    $region11: #{tpu_custom_call.1} parent=1 // pred_check_branch
      %23 = sbr.rel (0) target = $region13
    $region12: #{tpu_custom_call.1} parent=1 // pred_region
      %24 = dma.done [#allocation4], 512
    $region13: #{tpu_custom_call.1} parent=1 // pred_fallthru
      _
    %s25 = sld [smem:[#allocation2]]
    %v26 = vld [vmem:[#allocation3] sm:$0xff]
    %v27 = vld [vmem:[#allocation3 + $0x8] sm:$0xff]
    %v28 = vld [vmem:[#allocation3 + $0x10] sm:$0xff]
    %v29 = vld [vmem:[#allocation3 + $0x18] sm:$0xff]
    %v30 = vstv %s25
    %v31 = vmul.f32 %v30, %v26
    %v32 = vmul.f32 %v30, %v27
    %v33 = vmul.f32 %v30, %v28
    %v34 = vmul.f32 %v30, %v29
    %35 = vst [vmem:[#allocation6] sm:$0xff] %v31
    %36 = vst [vmem:[#allocation6 + $0x8] sm:$0xff] %v32
    %37 = vst [vmem:[#allocation6 + $0x10] sm:$0xff] %v33
    %38 = vst [vmem:[#allocation6 + $0x18] sm:$0xff] %v34
    // Predicated region
    $region14: #{tpu_custom_call.1} parent=1 // pred_check
      _
    $region15: #{tpu_custom_call.1} parent=1 // pred_check_branch
      %40 = sbr.rel (0) target = $region17
    $region16: #{tpu_custom_call.1} parent=1 // pred_region
      %s42 = ssub.s32 512, 512
      %43 = vsyncadd [#allocation5], %s42
      %s45 = sshll.u32 [#allocation6], 4
      %s46 = int_to_ptr.vmem [resolvable:$true] %s45
      %48 = dma.vmem_to_hbm [thread:$0]  %s46, 512, %s2, [#allocation5]
    $region17: #{tpu_custom_call.1} parent=1 // pred_fallthru
      _
    // Predicated region
    $region18: #{tpu_custom_call.1} parent=1 // pred_check
      _
    $region19: #{tpu_custom_call.1} parent=1 // pred_check_branch
      %50 = sbr.rel (0) target = $region21
    $region20: #{tpu_custom_call.1} parent=1 // pred_region
      %51 = dma.done [#allocation5], 512
    $region21: #{tpu_custom_call.1} parent=1 // pred_fallthru
      _
    %52 = vsyncpa [#allocation4], 1
    %53 = vsyncpa [#allocation5], 1

</llo_original>
